<compile_context>
chip_gen: v5e
topology: v5e:2x2
jax: 0.10.0
libtpu: 0.0.40
codegen_flags: <defaults>
</compile_context>

<pallas_src>
import math

import jax
import jax.numpy as jnp
from jax.experimental import pallas as pl
from jax.experimental.pallas import tpu as pltpu


QMAX = 127.0
QMIN = -128.0
EPS = 1e-8


def _round_up(x, m):
    return (x + m - 1) // m * m


def _sublane_align(dtype):
    # Sub-32-bit dtypes pack along sublanes: int8 vreg is [32,128], bf16 [16,128].
    return {1: 32, 2: 16}.get(jnp.dtype(dtype).itemsize, 8)


def _choose_tile(dim, preferred, align):
    # Use the preferred (MXU-friendly) tile if the dim is big enough,
    # otherwise one aligned block covering the whole (padded) dim.
    if dim >= preferred:
        return preferred
    return _round_up(dim, align)


def _select_code_dtype():
    """int8 codes + int32 accum where the MXU has an integer path (v4/v5/v6);
    bf16 codes + f32 accum on v7x / unknown chips (no int MXU; fp8 cannot hold
    the codes exactly)."""
    try:
        kind = jax.devices()[0].device_kind.lower()
    except Exception:
        kind = ""
    if any(v in kind for v in ("v4", "v5", "v6")):
        return jnp.int8, jnp.int32
    return jnp.bfloat16, jnp.float32


def _clamp_vmem(est_bytes):
    # Raise v5e's 16 MiB default scoped VMEM; stay well under v7x's 64 MiB physical.
    return max(32 << 20, min(int(est_bytes * 1.5) + (8 << 20), 56 << 20))


def _prepass_row_tile(rows, cols, align, budget_bytes=4 << 20):
    # Small divisor row tile: the prepass is memory-bound, so keep its f32 input
    # block <= ~4 MiB regardless of K (decoupled from the GEMM tiles).
    for t in (1024, 512, 256, 128, 64, 32, 16, 8):
        if t % align == 0 and rows % t == 0 and t * cols * 4 <= budget_bytes:
            return t
    return align


# ---------------------------------------------------------------------------
# Prepass: row-wise symmetric int8 fake quant -> integer codes + f32 scale.
# Used per-token for activations and ONCE per weight (per-output-channel).
# ---------------------------------------------------------------------------
def _rowwise_quant_kernel(x_ref, codes_ref, scale_ref):
    x = x_ref[...].astype(jnp.float32)
    absmax = jnp.max(jnp.abs(x), axis=-1, keepdims=True)       # (tr, 1)
    scale = jnp.maximum(absmax, EPS) / QMAX                     # (tr, 1)
    inv = 1.0 / scale
    codes = jnp.clip(jnp.round(x * inv), QMIN, QMAX)            # ints in [-127, 127]
    codes_ref[...] = codes.astype(codes_ref.dtype)              # exact in int8 / bf16
    scale_ref[...] = scale


def _rowwise_fake_quant(x2d, tr, code_dtype):
    R, C = x2d.shape
    code_bytes = jnp.dtype(code_dtype).itemsize
    est = 2 * tr * C * (4 + code_bytes) + 2 * tr * 4
    return pl.pallas_call(
        _rowwise_quant_kernel,
        out_shape=(jax.ShapeDtypeStruct((R, C), code_dtype),
                   jax.ShapeDtypeStruct((R, 1), jnp.float32)),
        grid_spec=pltpu.PrefetchScalarGridSpec(
            num_scalar_prefetch=0,
            grid=(R // tr,),
            in_specs=[pl.BlockSpec((tr, C), lambda i: (i, 0))],
            out_specs=[pl.BlockSpec((tr, C), lambda i: (i, 0)),
                       pl.BlockSpec((tr, 1), lambda i: (i, 0))],
        ),
        compiler_params=pltpu.CompilerParams(
            dimension_semantics=("parallel",),
            vmem_limit_bytes=_clamp_vmem(est)),
    )(x2d)


# ---------------------------------------------------------------------------
# Main GEMM: integer codes on the MXU, scales + (optional) bias applied
# post-accumulation in the k==last finalize.
# ---------------------------------------------------------------------------
def _make_gemm_kernel(has_bias, acc_dtype):
    def kernel(*refs):
        if has_bias:
            x_ref, w_ref, asc_ref, wsc_ref, b_ref, o_ref, acc_ref = refs
        else:
            x_ref, w_ref, asc_ref, wsc_ref, o_ref, acc_ref = refs
            b_ref = None
        k = pl.program_id(2)

        @pl.when(k == 0)
        def _():
            acc_ref[...] = jnp.zeros_like(acc_ref)

        # Standard (tm,tk)x(tk,tn) contraction: weight codes are pre-transposed,
        # so no per-tile transpose inside the K loop.
        acc_ref[...] += jax.lax.dot_general(
            x_ref[...], w_ref[...],
            dimension_numbers=(((1,), (0,)), ((), ())),
            preferred_element_type=acc_dtype)

        @pl.when(k == pl.num_programs(2) - 1)
        def _():
            y = acc_ref[...].astype(jnp.float32) * asc_ref[...] * wsc_ref[...]
            if has_bias:
                y = y + b_ref[...]
            o_ref[...] = y.astype(o_ref.dtype)

    return kernel


# ---------------------------------------------------------------------------
# One-time weight preparation (== the module's cached tmp_weight). Cache the
# returned dict across forward calls to avoid re-reading/re-quantizing weights.
# ---------------------------------------------------------------------------
def prepare_fake_quant_weight(weight, bias=None, *, tn=512, tk=1024,
                              code_dtype=None):
    if code_dtype is None:
        code_dtype, acc_dtype = _select_code_dtype()
    else:
        acc_dtype = jnp.int32 if jnp.dtype(code_dtype) == jnp.int8 else jnp.float32

    N, K = weight.shape
    tn = _choose_tile(N, tn, 128)    # lane-dense output stores
    tk = _choose_tile(K, tk, 128)
    Np, Kp = _round_up(N, tn), _round_up(K, tk)

    w2d = weight
    if (Np, Kp) != (N, K):           # only pad when actually ragged
        w2d = jnp.pad(weight, ((0, Np - N), (0, Kp - K)))

    tr_w = _prepass_row_tile(Np, Kp, _sublane_align(code_dtype))
    w_codes, w_scale = _rowwise_fake_quant(w2d, tr_w, code_dtype)  # (Np,Kp), (Np,1)

    # One-time transpose so the GEMM consumes the weight in (Kp, Np) layout.
    w_codes_t = jnp.transpose(w_codes)                # (Kp, Np)
    w_scale_row = w_scale.reshape(1, Np)              # per-output-column scale

    bias_row = None
    if bias is not None:
        bias_row = jnp.pad(bias.astype(jnp.float32).reshape(1, N),
                           ((0, 0), (0, Np - N)))

    return dict(w_codes_t=w_codes_t, w_scale_row=w_scale_row, bias_row=bias_row,
                N=N, K=K, Np=Np, Kp=Kp, tn=tn, tk=tk,
                code_dtype=code_dtype, acc_dtype=acc_dtype)


def fake_quant_linear_prepared(x, prep, *, tm=512):
    """x: (..., K) -> (..., N) using a prepared (cached) weight."""
    lead = x.shape[:-1]
    K = x.shape[-1]
    assert K == prep["K"], (K, prep["K"])
    M = math.prod(lead) if lead else 1

    code_dtype, acc_dtype = prep["code_dtype"], prep["acc_dtype"]
    N, Np, Kp, tn, tk = prep["N"], prep["Np"], prep["Kp"], prep["tn"], prep["tk"]

    align_m = _sublane_align(code_dtype)
    tm = _choose_tile(M, tm, align_m)
    Mp = _round_up(M, tm)

    x2d = x.reshape(M, K)
    if (Mp, Kp) != (M, K):
        x2d = jnp.pad(x2d, ((0, Mp - M), (0, Kp - K)))

    # a_qdq (per-token) with its own small row tile (decoupled from GEMM tiles).
    tr_x = _prepass_row_tile(Mp, Kp, align_m)
    x_codes, a_scale = _rowwise_fake_quant(x2d, tr_x, code_dtype)  # (Mp,Kp), (Mp,1)

    has_bias = prep["bias_row"] is not None
    kernel = _make_gemm_kernel(has_bias, acc_dtype)

    in_specs = [
        pl.BlockSpec((tm, tk), lambda i, j, k: (i, k)),    # activation codes
        pl.BlockSpec((tk, tn), lambda i, j, k: (k, j)),    # weight codes (pre-transposed)
        pl.BlockSpec((tm, 1), lambda i, j, k: (i, 0)),     # per-token scale
        pl.BlockSpec((1, tn), lambda i, j, k: (0, j)),     # per-channel scale
    ]
    operands = [x_codes, prep["w_codes_t"], a_scale, prep["w_scale_row"]]
    if has_bias:
        in_specs.append(pl.BlockSpec((1, tn), lambda i, j, k: (0, j)))
        operands.append(prep["bias_row"])

    code_bytes = jnp.dtype(code_dtype).itemsize
    out_bytes = jnp.dtype(x.dtype).itemsize
    est = (2 * (tm * tk + tk * tn) * code_bytes     # double-buffered code tiles
           + 2 * tm * tn * out_bytes                # double-buffered output tile
           + tm * tn * 4                            # accumulator scratch
           + 2 * (tm + 2 * tn) * 4)                 # scales + bias (tiny)

    grid = (Mp // tm, Np // tn, Kp // tk)
    out = pl.pallas_call(
        kernel,
        out_shape=jax.ShapeDtypeStruct((Mp, Np), x.dtype),
        grid_spec=pltpu.PrefetchScalarGridSpec(
            num_scalar_prefetch=0,
            grid=grid,
            in_specs=in_specs,
            out_specs=pl.BlockSpec((tm, tn), lambda i, j, k: (i, j)),
            scratch_shapes=[pltpu.VMEM((tm, tn), acc_dtype)],
        ),
        compiler_params=pltpu.CompilerParams(
            dimension_semantics=("parallel", "parallel", "arbitrary"),
            vmem_limit_bytes=_clamp_vmem(est)),
    )(*operands)

    return out[:M, :N].reshape(*lead, N)


def fake_quant_linear(x, weight, bias=None, *, tm=512, tn=512, tk=1024,
                      code_dtype=None):
    """Convenience wrapper (prepares the weight every call; prefer caching
    prepare_fake_quant_weight() across calls, like the module's tmp_weight)."""
    prep = prepare_fake_quant_weight(weight, bias, tn=tn, tk=tk,
                                     code_dtype=code_dtype)
    return fake_quant_linear_prepared(x, prep, tm=tm)


def _reference(x, weight, bias):
    """Pure-JAX reference of the same fake-quant linear."""
    xf = x.astype(jnp.float32)
    wf = weight.astype(jnp.float32)
    a_scale = jnp.maximum(jnp.max(jnp.abs(xf), axis=-1, keepdims=True), EPS) / QMAX
    x_q = jnp.clip(jnp.round(xf / a_scale), QMIN, QMAX) * a_scale
    w_scale = jnp.maximum(jnp.max(jnp.abs(wf), axis=-1, keepdims=True), EPS) / QMAX
    w_q = jnp.clip(jnp.round(wf / w_scale), QMIN, QMAX) * w_scale
    y = jnp.einsum("...k,nk->...n", x_q, w_q, precision=jax.lax.Precision.HIGHEST)
    if bias is not None:
        y = y + bias
    return y.astype(x.dtype)


if __name__ == "__main__":
    key = jax.random.PRNGKey(0)
    kx, kw, kb, kx2, kw2 = jax.random.split(key, 5)

    # Case 1: small shapes with bias, ragged K/N (K=96 -> 128, N=160 -> 256).
    batch, seq, in_features, out_features = 2, 8, 96, 160
    x = jax.random.normal(kx, (batch, seq, in_features), dtype=jnp.float32)
    weight = jax.random.normal(kw, (out_features, in_features), dtype=jnp.float32) * 0.1
    bias = jax.random.normal(kb, (out_features,), dtype=jnp.float32) * 0.01

    prep = prepare_fake_quant_weight(weight, bias)          # one-time / cacheable
    y = fake_quant_linear_prepared(x, prep)
    y = jax.block_until_ready(y)
    y_ref = _reference(x, weight, bias)
    assert y.shape == (batch, seq, out_features)
    assert jnp.allclose(y, y_ref, atol=1e-3, rtol=1e-3), (
        "case1 mismatch vs reference, max abs err = "
        f"{float(jnp.max(jnp.abs(y - y_ref)))}")

    # Case 2: no bias, multiple K steps (tk=128 on K=256) to exercise the
    # accumulator init/finalize path.
    x2 = jax.random.normal(kx2, (1, 64, 256), dtype=jnp.float32)
    w2 = jax.random.normal(kw2, (384, 256), dtype=jnp.float32) * 0.05
    y2 = jax.block_until_ready(fake_quant_linear(x2, w2, None, tk=128))
    y2_ref = _reference(x2, w2, None)
    assert y2.shape == (1, 64, 384)
    assert jnp.allclose(y2, y2_ref, atol=1e-3, rtol=1e-3), (
        "case2 mismatch vs reference, max abs err = "
        f"{float(jnp.max(jnp.abs(y2 - y2_ref)))}")

    print("KERNEL_OK")
</pallas_src>

<mosaic_0001>
module attributes {stable_mosaic.version = 11 : i64} {
  func.func @_rowwise_quant_kernel(%arg0: i32, %arg1: memref<256x128xf32, #tpu.memory_space<vmem>>, %arg2: memref<256x128xbf16, #tpu.memory_space<vmem>>, %arg3: memref<256x1xf32, #tpu.memory_space<vmem>>) attributes {dimension_semantics = [#tpu.dimension_semantics<parallel>], iteration_bounds = array<i64: 1>, scalar_prefetch = 0 : i64, scratch_operands = 0 : i64, tpu.core_type = #tpu.core_type<tc>, window_params = [{transform_indices = @transform_0, window_bounds = array<i64: 256, 128>}, {transform_indices = @transform_1, window_bounds = array<i64: 256, 128>}, {transform_indices = @transform_2, window_bounds = array<i64: 256, 1>}]} {
    %c0 = arith.constant 0 : index
    %c0_0 = arith.constant 0 : index
    %0 = vector.load %arg1[%c0, %c0_0] : memref<256x128xf32, #tpu.memory_space<vmem>>, vector<256x128xf32>
    %1 = math.absf %0 : vector<256x128xf32>
    %cst = arith.constant dense<0xFF800000> : vector<256xf32>
    %2 = vector.multi_reduction <maximumf>, %1, %cst [1] : vector<256x128xf32> to vector<256xf32>
    %3 = vector.shape_cast %2 : vector<256xf32> to vector<256x1xf32>
    %cst_1 = arith.constant 9.99999993E-9 : f32
    %4 = vector.broadcast %cst_1 : f32 to vector<256x1xf32>
    %5 = arith.maximumf %3, %4 : vector<256x1xf32>
    %cst_2 = arith.constant 1.270000e+02 : f32
    %6 = vector.broadcast %cst_2 : f32 to vector<256x1xf32>
    %7 = arith.divf %5, %6 : vector<256x1xf32>
    %cst_3 = arith.constant 1.000000e+00 : f32
    %8 = vector.broadcast %cst_3 : f32 to vector<256x1xf32>
    %9 = arith.divf %8, %7 : vector<256x1xf32>
    %10 = vector.broadcast %9 : vector<256x1xf32> to vector<256x128xf32>
    %11 = arith.mulf %0, %10 : vector<256x128xf32>
    %12 = math.roundeven %11 : vector<256x128xf32>
    %cst_4 = arith.constant -1.280000e+02 : f32
    %cst_5 = arith.constant 1.270000e+02 : f32
    %13 = vector.broadcast %cst_4 : f32 to vector<256x128xf32>
    %14 = arith.maximumf %13, %12 : vector<256x128xf32>
    %15 = vector.broadcast %cst_5 : f32 to vector<256x128xf32>
    %16 = arith.minimumf %15, %14 : vector<256x128xf32>
    %17 = arith.truncf %16 : vector<256x128xf32> to vector<256x128xbf16>
    %c0_6 = arith.constant 0 : index
    %c0_7 = arith.constant 0 : index
    %18 = vector.load %arg2[%c0_6, %c0_7] : memref<256x128xbf16, #tpu.memory_space<vmem>>, vector<256x128xbf16>
    tpu.vector_store %arg2[%c0_6, %c0_7], %17 {strides = array<i32>} : memref<256x128xbf16, #tpu.memory_space<vmem>>, vector<256x128xbf16>,
    %c0_8 = arith.constant 0 : index
    %c0_9 = arith.constant 0 : index
    %19 = vector.load %arg3[%c0_8, %c0_9] : memref<256x1xf32, #tpu.memory_space<vmem>>, vector<256x1xf32>
    tpu.vector_store %arg3[%c0_8, %c0_9], %7 {strides = array<i32>} : memref<256x1xf32, #tpu.memory_space<vmem>>, vector<256x1xf32>,
    return
  }
  func.func @transform_0(%arg0: i32) -> (i32, i32) {
    %c0_i32 = arith.constant 0 : i32
    %c0_i32_0 = arith.constant 0 : i32
    return %arg0, %c0_i32 : i32, i32
  }
  func.func @transform_1(%arg0: i32) -> (i32, i32) {
    %c0_i32 = arith.constant 0 : i32
    %c0_i32_0 = arith.constant 0 : i32
    return %arg0, %c0_i32 : i32, i32
  }
  func.func @transform_2(%arg0: i32) -> (i32, i32) {
    %c0_i32 = arith.constant 0 : i32
    %c0_i32_0 = arith.constant 0 : i32
    return %arg0, %c0_i32 : i32, i32
  }
}

</mosaic_0001>

<llo_original>
// kernel: tpu_custom_call.1
$region0: #{tpu_custom_call.1}
  #allocation0 [shape = 'u32[]', space=smem, size = 0x4, offset = 0x4, fixed_abs, tag = 'smem constant byte address 0x4 - core index']
  #allocation1 [shape = 'u32[72,128]{1,0:T(1,128)}', space=vmem, size = 0x9000, scoped, tag = 'internal scratch']
  %s0 = inlined_call_operand.hbm [shape: f32[256,128], index: 0, kind: input, shape index: {}]
  %s1 = inlined_call_operand.hbm [shape: bf16[256,128], index: 1, kind: output, shape index: {0}]
  %s2 = inlined_call_operand.vmem [shape: f32[256,1], index: 2, kind: output, shape index: {1}]
  %3 = xla_tuple %s1, %s2
  %s4 = sld [smem:[#allocation0]]
  $region26: #{tpu_custom_call.1} parent=0
    _
  %s6 = ssub.s32 1, %s4
  %s7 = scalar_select 0, %s6, %s4
  $region1: #{tpu_custom_call.1} parent=0
    #allocation2 [shape = 'u8[131072]{0}', space=vmem, size = 0x20000, scoped, tag = 'input window, operand 0, single buffered']
    #allocation3 [shape = 's32[1]{0}', space=sflag, size = 0x4, scoped, tag = 'scoped memory for tpu_custom_call.1']
    #allocation4 [shape = 's32[1]{0}', space=sflag, size = 0x4, scoped, tag = 'scoped memory for tpu_custom_call.1']
    #allocation5 [shape = 'u8[65536]{0}', space=vmem, size = 0x10000, scoped, tag = 'output window, operand 0, single buffered']
    %8 = vsyncpa [#allocation3], 0
    %9 = vsyncpa [#allocation4], 0
    // Predicated region
    $region2: #{tpu_custom_call.1} parent=1 // pred_check
      _
    $region3: #{tpu_custom_call.1} parent=1 // pred_check_branch
      %11 = sbr.rel (0) target = $region5
    $region4: #{tpu_custom_call.1} parent=1 // pred_region
      %13 = vsyncadd [#allocation3], 0
      %s14 = sshll.u32 %s0, 4
      %s15 = int_to_ptr.hbm [resolvable:$true] %s14
      %s16 = sshll.u32 [#allocation2], 4
      %s17 = int_to_ptr.vmem [resolvable:$true] %s16
      %22 = dma.hbm_to_vmem [thread:$0]  %s15, 4096, %s17, [#allocation3], 128, 128, 8
    $region5: #{tpu_custom_call.1} parent=1 // pred_fallthru
      _
    // Predicated region
    $region6: #{tpu_custom_call.1} parent=1 // pred_check
      _
    $region7: #{tpu_custom_call.1} parent=1 // pred_check_branch
      %24 = sbr.rel (0) target = $region9
    $region8: #{tpu_custom_call.1} parent=1 // pred_region
      %26 = dma.done [#allocation3], 4096
    $region9: #{tpu_custom_call.1} parent=1 // pred_fallthru
      _
    %v27 = vld [vmem:[#allocation2] sm:$0xff]
    %v28 = vld [vmem:[#allocation2 + $0x8] sm:$0xff]
    %v29 = vld [vmem:[#allocation2 + $0x10] sm:$0xff]
    %v30 = vld [vmem:[#allocation2 + $0x18] sm:$0xff]
    %v31 = vld [vmem:[#allocation2 + $0x20] sm:$0xff]
    %v32 = vld [vmem:[#allocation2 + $0x28] sm:$0xff]
    %v33 = vld [vmem:[#allocation2 + $0x30] sm:$0xff]
    %v34 = vld [vmem:[#allocation2 + $0x38] sm:$0xff]
    %v35 = vld [vmem:[#allocation2 + $0x40] sm:$0xff]
    %v36 = vld [vmem:[#allocation2 + $0x48] sm:$0xff]
    %v37 = vld [vmem:[#allocation2 + $0x50] sm:$0xff]
    %v38 = vld [vmem:[#allocation2 + $0x58] sm:$0xff]
    %v39 = vld [vmem:[#allocation2 + $0x60] sm:$0xff]
    %v40 = vld [vmem:[#allocation2 + $0x68] sm:$0xff]
    %v41 = vld [vmem:[#allocation2 + $0x70] sm:$0xff]
    %v42 = vld [vmem:[#allocation2 + $0x78] sm:$0xff]
    %v43 = vld [vmem:[#allocation2 + $0x80] sm:$0xff]
    %v44 = vld [vmem:[#allocation2 + $0x88] sm:$0xff]
    %v45 = vld [vmem:[#allocation2 + $0x90] sm:$0xff]
    %v46 = vld [vmem:[#allocation2 + $0x98] sm:$0xff]
    %v47 = vld [vmem:[#allocation2 + $0xa0] sm:$0xff]
    %v48 = vld [vmem:[#allocation2 + $0xa8] sm:$0xff]
    %v49 = vld [vmem:[#allocation2 + $0xb0] sm:$0xff]
    %v50 = vld [vmem:[#allocation2 + $0xb8] sm:$0xff]
    %v51 = vld [vmem:[#allocation2 + $0xc0] sm:$0xff]
    %v52 = vld [vmem:[#allocation2 + $0xc8] sm:$0xff]
    %v53 = vld [vmem:[#allocation2 + $0xd0] sm:$0xff]
    %v54 = vld [vmem:[#allocation2 + $0xd8] sm:$0xff]
    %v55 = vld [vmem:[#allocation2 + $0xe0] sm:$0xff]
    %v56 = vld [vmem:[#allocation2 + $0xe8] sm:$0xff]
    %v57 = vld [vmem:[#allocation2 + $0xf0] sm:$0xff]
    %v58 = vld [vmem:[#allocation2 + $0xf8] sm:$0xff]
    %v59 = vand.u32 2147483647, %v27
    %v60 = vand.u32 2147483647, %v28
    %v61 = vand.u32 2147483647, %v29
    %v62 = vand.u32 2147483647, %v30
    %v63 = vand.u32 2147483647, %v31
    %v64 = vand.u32 2147483647, %v32
    %v65 = vand.u32 2147483647, %v33
    %v66 = vand.u32 2147483647, %v34
    %v67 = vand.u32 2147483647, %v35
    %v68 = vand.u32 2147483647, %v36
    %v69 = vand.u32 2147483647, %v37
    %v70 = vand.u32 2147483647, %v38
    %v71 = vand.u32 2147483647, %v39
    %v72 = vand.u32 2147483647, %v40
    %v73 = vand.u32 2147483647, %v41
    %v74 = vand.u32 2147483647, %v42
    %v75 = vand.u32 2147483647, %v43
    %v76 = vand.u32 2147483647, %v44
    %v77 = vand.u32 2147483647, %v45
    %v78 = vand.u32 2147483647, %v46
    %v79 = vand.u32 2147483647, %v47
    %v80 = vand.u32 2147483647, %v48
    %v81 = vand.u32 2147483647, %v49
    %v82 = vand.u32 2147483647, %v50
    %v83 = vand.u32 2147483647, %v51
    %v84 = vand.u32 2147483647, %v52
    %v85 = vand.u32 2147483647, %v53
    %v86 = vand.u32 2147483647, %v54
    %v87 = vand.u32 2147483647, %v55
    %v88 = vand.u32 2147483647, %v56
    %v89 = vand.u32 2147483647, %v57
    %v90 = vand.u32 2147483647, %v58
    %91 = vmax.xlane.f32.xlu0 %v59
    %v92 = vpop.xlane.xlu0 %91
    %93 = vmax.xlane.f32.xlu0 %v60
    %v94 = vpop.xlane.xlu0 %93
    %95 = vmax.xlane.f32.xlu0 %v61
    %v96 = vpop.xlane.xlu0 %95
    %97 = vmax.xlane.f32.xlu0 %v62
    %v98 = vpop.xlane.xlu0 %97
    %99 = vmax.xlane.f32.xlu0 %v63
    %v100 = vpop.xlane.xlu0 %99
    %101 = vmax.xlane.f32.xlu0 %v64
    %v102 = vpop.xlane.xlu0 %101
    %103 = vmax.xlane.f32.xlu0 %v65
    %v104 = vpop.xlane.xlu0 %103
    %105 = vmax.xlane.f32.xlu0 %v66
    %v106 = vpop.xlane.xlu0 %105
    %107 = vmax.xlane.f32.xlu0 %v67
    %v108 = vpop.xlane.xlu0 %107
    %109 = vmax.xlane.f32.xlu0 %v68
    %v110 = vpop.xlane.xlu0 %109
    %111 = vmax.xlane.f32.xlu0 %v69
    %v112 = vpop.xlane.xlu0 %111
    %113 = vmax.xlane.f32.xlu0 %v70
    %v114 = vpop.xlane.xlu0 %113
    %115 = vmax.xlane.f32.xlu0 %v71
    %v116 = vpop.xlane.xlu0 %115
    %117 = vmax.xlane.f32.xlu0 %v72
    %v118 = vpop.xlane.xlu0 %117
    %119 = vmax.xlane.f32.xlu0 %v73
    %v120 = vpop.xlane.xlu0 %119
    %121 = vmax.xlane.f32.xlu0 %v74
    %v122 = vpop.xlane.xlu0 %121
    %123 = vmax.xlane.f32.xlu0 %v75
    %v124 = vpop.xlane.xlu0 %123
    %125 = vmax.xlane.f32.xlu0 %v76
    %v126 = vpop.xlane.xlu0 %125
    %127 = vmax.xlane.f32.xlu0 %v77
    %v128 = vpop.xlane.xlu0 %127
    %129 = vmax.xlane.f32.xlu0 %v78
    %v130 = vpop.xlane.xlu0 %129
    %131 = vmax.xlane.f32.xlu0 %v79
    %v132 = vpop.xlane.xlu0 %131
    %133 = vmax.xlane.f32.xlu0 %v80
    %v134 = vpop.xlane.xlu0 %133
    %135 = vmax.xlane.f32.xlu0 %v81
    %v136 = vpop.xlane.xlu0 %135
    %137 = vmax.xlane.f32.xlu0 %v82
    %v138 = vpop.xlane.xlu0 %137
    %139 = vmax.xlane.f32.xlu0 %v83
    %v140 = vpop.xlane.xlu0 %139
    %141 = vmax.xlane.f32.xlu0 %v84
    %v142 = vpop.xlane.xlu0 %141
    %143 = vmax.xlane.f32.xlu0 %v85
    %v144 = vpop.xlane.xlu0 %143
    %145 = vmax.xlane.f32.xlu0 %v86
    %v146 = vpop.xlane.xlu0 %145
    %147 = vmax.xlane.f32.xlu0 %v87
    %v148 = vpop.xlane.xlu0 %147
    %149 = vmax.xlane.f32.xlu0 %v88
    %v150 = vpop.xlane.xlu0 %149
    %151 = vmax.xlane.f32.xlu0 %v89
    %v152 = vpop.xlane.xlu0 %151
    %153 = vmax.xlane.f32.xlu0 %v90
    %v154 = vpop.xlane.xlu0 %153
    %v155 = vmax.f32 %v92, 1e-08
    %v156 = vmax.f32 %v94, 1e-08
    %v157 = vmax.f32 %v96, 1e-08
    %v158 = vmax.f32 %v98, 1e-08
    %v159 = vmax.f32 %v100, 1e-08
    %v160 = vmax.f32 %v102, 1e-08
    %v161 = vmax.f32 %v104, 1e-08
    %v162 = vmax.f32 %v106, 1e-08
    %v163 = vmax.f32 %v108, 1e-08
    %v164 = vmax.f32 %v110, 1e-08
    %v165 = vmax.f32 %v112, 1e-08
    %v166 = vmax.f32 %v114, 1e-08
    %v167 = vmax.f32 %v116, 1e-08
    %v168 = vmax.f32 %v118, 1e-08
    %v169 = vmax.f32 %v120, 1e-08
    %v170 = vmax.f32 %v122, 1e-08
    %v171 = vmax.f32 %v124, 1e-08
    %v172 = vmax.f32 %v126, 1e-08
    %v173 = vmax.f32 %v128, 1e-08
    %v174 = vmax.f32 %v130, 1e-08
    %v175 = vmax.f32 %v132, 1e-08
    %v176 = vmax.f32 %v134, 1e-08
    %v177 = vmax.f32 %v136, 1e-08
    %v178 = vmax.f32 %v138, 1e-08
    %v179 = vmax.f32 %v140, 1e-08
    %v180 = vmax.f32 %v142, 1e-08
    %v181 = vmax.f32 %v144, 1e-08
    %v182 = vmax.f32 %v146, 1e-08
    %v183 = vmax.f32 %v148, 1e-08
    %v184 = vmax.f32 %v150, 1e-08
    %v185 = vmax.f32 %v152, 1e-08
    %v186 = vmax.f32 %v154, 1e-08
    %v187 = vrcp.pop 127.0
    %v188 = vmul.f32 127.0, %v187
    %v189 = vsub.f32 1.0, %v188
    %v190 = vmul.f32 %v187, %v189
    %v191 = vadd.f32 %v187, %v190
    %vm192 = vweird.f32 %v187
    %v193 = vsel %vm192, %v187, %v191
    %v194 = vmul.f32 %v155, %v193
    %v195 = vmul.f32 %v156, %v193
    %v196 = vmul.f32 %v157, %v193
    %v197 = vmul.f32 %v158, %v193
    %v198 = vmul.f32 %v159, %v193
    %v199 = vmul.f32 %v160, %v193
    %v200 = vmul.f32 %v161, %v193
    %v201 = vmul.f32 %v162, %v193
    %v202 = vmul.f32 %v163, %v193
    %v203 = vmul.f32 %v164, %v193
    %v204 = vmul.f32 %v165, %v193
    %v205 = vmul.f32 %v166, %v193
    %v206 = vmul.f32 %v167, %v193
    %v207 = vmul.f32 %v168, %v193
    %v208 = vmul.f32 %v169, %v193
    %v209 = vmul.f32 %v170, %v193
    %v210 = vmul.f32 %v171, %v193
    %v211 = vmul.f32 %v172, %v193
    %v212 = vmul.f32 %v173, %v193
    %v213 = vmul.f32 %v174, %v193
    %v214 = vmul.f32 %v175, %v193
    %v215 = vmul.f32 %v176, %v193
    %v216 = vmul.f32 %v177, %v193
    %v217 = vmul.f32 %v178, %v193
    %v218 = vmul.f32 %v179, %v193
    %v219 = vmul.f32 %v180, %v193
    %v220 = vmul.f32 %v181, %v193
    %v221 = vmul.f32 %v182, %v193
    %v222 = vmul.f32 %v183, %v193
    %v223 = vmul.f32 %v184, %v193
    %v224 = vmul.f32 %v185, %v193
    %v225 = vmul.f32 %v186, %v193
    %v226 = vrcp.pop %v194
    %v227 = vmul.f32 %v194, %v226
    %v228 = vsub.f32 1.0, %v227
    %v229 = vmul.f32 %v226, %v228
    %v230 = vadd.f32 %v226, %v229
    %vm231 = vweird.f32 %v194
    %vm232 = vweird.f32 %v226
    %vm233 = vmor %vm231, %vm232
    %v234 = vsel %vm233, %v226, %v230
    %v235 = vand.u32 2147483647, %v194
    %vm236 = vcmp.eq.f32.partialorder %v235, 8.507059e+37
    %v237 = vand.u32 %v194, 2147483648
    %v238 = vor.u32 1.1754944e-38, %v237
    %v239 = vsel %vm236, %v238, %v234
    %v240 = vmul.f32 1.0, %v239
    %v241 = vrcp.pop %v195
    %v242 = vmul.f32 %v195, %v241
    %v243 = vsub.f32 1.0, %v242
    %v244 = vmul.f32 %v241, %v243
    %v245 = vadd.f32 %v241, %v244
    %vm246 = vweird.f32 %v195
    %vm247 = vweird.f32 %v241
    %vm248 = vmor %vm246, %vm247
    %v249 = vsel %vm248, %v241, %v245
    %v250 = vand.u32 2147483647, %v195
    %vm251 = vcmp.eq.f32.partialorder %v250, 8.507059e+37
    %v252 = vand.u32 %v195, 2147483648
    %v253 = vor.u32 1.1754944e-38, %v252
    %v254 = vsel %vm251, %v253, %v249
    %v255 = vmul.f32 1.0, %v254
    %v256 = vrcp.pop %v196
    %v257 = vmul.f32 %v196, %v256
    %v258 = vsub.f32 1.0, %v257
    %v259 = vmul.f32 %v256, %v258
    %v260 = vadd.f32 %v256, %v259
    %vm261 = vweird.f32 %v196
    %vm262 = vweird.f32 %v256
    %vm263 = vmor %vm261, %vm262
    %v264 = vsel %vm263, %v256, %v260
    %v265 = vand.u32 2147483647, %v196
    %vm266 = vcmp.eq.f32.partialorder %v265, 8.507059e+37
    %v267 = vand.u32 %v196, 2147483648
    %v268 = vor.u32 1.1754944e-38, %v267
    %v269 = vsel %vm266, %v268, %v264
    %v270 = vmul.f32 1.0, %v269
    %v271 = vrcp.pop %v197
    %v272 = vmul.f32 %v197, %v271
    %v273 = vsub.f32 1.0, %v272
    %v274 = vmul.f32 %v271, %v273
    %v275 = vadd.f32 %v271, %v274
    %vm276 = vweird.f32 %v197
    %vm277 = vweird.f32 %v271
    %vm278 = vmor %vm276, %vm277
    %v279 = vsel %vm278, %v271, %v275
    %v280 = vand.u32 2147483647, %v197
    %vm281 = vcmp.eq.f32.partialorder %v280, 8.507059e+37
    %v282 = vand.u32 %v197, 2147483648
    %v283 = vor.u32 1.1754944e-38, %v282
    %v284 = vsel %vm281, %v283, %v279
    %v285 = vmul.f32 1.0, %v284
    %v286 = vrcp.pop %v198
    %v287 = vmul.f32 %v198, %v286
    %v288 = vsub.f32 1.0, %v287
    %v289 = vmul.f32 %v286, %v288
    %v290 = vadd.f32 %v286, %v289
    %vm291 = vweird.f32 %v198
    %vm292 = vweird.f32 %v286
    %vm293 = vmor %vm291, %vm292
    %v294 = vsel %vm293, %v286, %v290
    %v295 = vand.u32 2147483647, %v198
    %vm296 = vcmp.eq.f32.partialorder %v295, 8.507059e+37
    %v297 = vand.u32 %v198, 2147483648
    %v298 = vor.u32 1.1754944e-38, %v297
    %v299 = vsel %vm296, %v298, %v294
    %v300 = vmul.f32 1.0, %v299
    %v301 = vrcp.pop %v199
    %v302 = vmul.f32 %v199, %v301
    %v303 = vsub.f32 1.0, %v302
    %v304 = vmul.f32 %v301, %v303
    %v305 = vadd.f32 %v301, %v304
    %vm306 = vweird.f32 %v199
    %vm307 = vweird.f32 %v301
    %vm308 = vmor %vm306, %vm307
    %v309 = vsel %vm308, %v301, %v305
    %v310 = vand.u32 2147483647, %v199
    %vm311 = vcmp.eq.f32.partialorder %v310, 8.507059e+37
    %v312 = vand.u32 %v199, 2147483648
    %v313 = vor.u32 1.1754944e-38, %v312
    %v314 = vsel %vm311, %v313, %v309
    %v315 = vmul.f32 1.0, %v314
    %v316 = vrcp.pop %v200
    %v317 = vmul.f32 %v200, %v316
    %v318 = vsub.f32 1.0, %v317
    %v319 = vmul.f32 %v316, %v318
    %v320 = vadd.f32 %v316, %v319
    %vm321 = vweird.f32 %v200
    %vm322 = vweird.f32 %v316
    %vm323 = vmor %vm321, %vm322
    %v324 = vsel %vm323, %v316, %v320
    %v325 = vand.u32 2147483647, %v200
    %vm326 = vcmp.eq.f32.partialorder %v325, 8.507059e+37
    %v327 = vand.u32 %v200, 2147483648
    %v328 = vor.u32 1.1754944e-38, %v327
    %v329 = vsel %vm326, %v328, %v324
    %v330 = vmul.f32 1.0, %v329
    %v331 = vrcp.pop %v201
    %v332 = vmul.f32 %v201, %v331
    %v333 = vsub.f32 1.0, %v332
    %v334 = vmul.f32 %v331, %v333
    %v335 = vadd.f32 %v331, %v334
    %vm336 = vweird.f32 %v201
    %vm337 = vweird.f32 %v331
    %vm338 = vmor %vm336, %vm337
    %v339 = vsel %vm338, %v331, %v335
    %v340 = vand.u32 2147483647, %v201
    %vm341 = vcmp.eq.f32.partialorder %v340, 8.507059e+37
    %v342 = vand.u32 %v201, 2147483648
    %v343 = vor.u32 1.1754944e-38, %v342
    %v344 = vsel %vm341, %v343, %v339
    %v345 = vmul.f32 1.0, %v344
    %v346 = vrcp.pop %v202
    %v347 = vmul.f32 %v202, %v346
    %v348 = vsub.f32 1.0, %v347
    %v349 = vmul.f32 %v346, %v348
    %v350 = vadd.f32 %v346, %v349
    %vm351 = vweird.f32 %v202
    %vm352 = vweird.f32 %v346
    %vm353 = vmor %vm351, %vm352
    %v354 = vsel %vm353, %v346, %v350
    %v355 = vand.u32 2147483647, %v202
    %vm356 = vcmp.eq.f32.partialorder %v355, 8.507059e+37
    %v357 = vand.u32 %v202, 2147483648
    %v358 = vor.u32 1.1754944e-38, %v357
    %v359 = vsel %vm356, %v358, %v354
    %v360 = vmul.f32 1.0, %v359
    %v361 = vrcp.pop %v203
    %v362 = vmul.f32 %v203, %v361
    %v363 = vsub.f32 1.0, %v362
    %v364 = vmul.f32 %v361, %v363
    %v365 = vadd.f32 %v361, %v364
    %vm366 = vweird.f32 %v203
    %vm367 = vweird.f32 %v361
    %vm368 = vmor %vm366, %vm367
    %v369 = vsel %vm368, %v361, %v365
    %v370 = vand.u32 2147483647, %v203
    %vm371 = vcmp.eq.f32.partialorder %v370, 8.507059e+37
    %v372 = vand.u32 %v203, 2147483648
    %v373 = vor.u32 1.1754944e-38, %v372
    %v374 = vsel %vm371, %v373, %v369
    %v375 = vmul.f32 1.0, %v374
    %v376 = vrcp.pop %v204
    %v377 = vmul.f32 %v204, %v376
    %v378 = vsub.f32 1.0, %v377
    %v379 = vmul.f32 %v376, %v378
    %v380 = vadd.f32 %v376, %v379
    %vm381 = vweird.f32 %v204
    %vm382 = vweird.f32 %v376
    %vm383 = vmor %vm381, %vm382
    %v384 = vsel %vm383, %v376, %v380
    %v385 = vand.u32 2147483647, %v204
    %vm386 = vcmp.eq.f32.partialorder %v385, 8.507059e+37
    %v387 = vand.u32 %v204, 2147483648
    %v388 = vor.u32 1.1754944e-38, %v387
    %v389 = vsel %vm386, %v388, %v384
    %v390 = vmul.f32 1.0, %v389
    %v391 = vrcp.pop %v205
    %v392 = vmul.f32 %v205, %v391
    %v393 = vsub.f32 1.0, %v392
    %v394 = vmul.f32 %v391, %v393
    %v395 = vadd.f32 %v391, %v394
    %vm396 = vweird.f32 %v205
    %vm397 = vweird.f32 %v391
    %vm398 = vmor %vm396, %vm397
    %v399 = vsel %vm398, %v391, %v395
    %v400 = vand.u32 2147483647, %v205
    %vm401 = vcmp.eq.f32.partialorder %v400, 8.507059e+37
    %v402 = vand.u32 %v205, 2147483648
    %v403 = vor.u32 1.1754944e-38, %v402
    %v404 = vsel %vm401, %v403, %v399
    %v405 = vmul.f32 1.0, %v404
    %v406 = vrcp.pop %v206
    %v407 = vmul.f32 %v206, %v406
    %v408 = vsub.f32 1.0, %v407
    %v409 = vmul.f32 %v406, %v408
    %v410 = vadd.f32 %v406, %v409
    %vm411 = vweird.f32 %v206
    %vm412 = vweird.f32 %v406
    %vm413 = vmor %vm411, %vm412
    %v414 = vsel %vm413, %v406, %v410
    %v415 = vand.u32 2147483647, %v206
    %vm416 = vcmp.eq.f32.partialorder %v415, 8.507059e+37
    %v417 = vand.u32 %v206, 2147483648
    %v418 = vor.u32 1.1754944e-38, %v417
    %v419 = vsel %vm416, %v418, %v414
    %v420 = vmul.f32 1.0, %v419
    %v421 = vrcp.pop %v207
    %v422 = vmul.f32 %v207, %v421
    %v423 = vsub.f32 1.0, %v422
    %v424 = vmul.f32 %v421, %v423
    %v425 = vadd.f32 %v421, %v424
    %vm426 = vweird.f32 %v207
    %vm427 = vweird.f32 %v421
    %vm428 = vmor %vm426, %vm427
    %v429 = vsel %vm428, %v421, %v425
    %v430 = vand.u32 2147483647, %v207
    %vm431 = vcmp.eq.f32.partialorder %v430, 8.507059e+37
    %v432 = vand.u32 %v207, 2147483648
    %v433 = vor.u32 1.1754944e-38, %v432
    %v434 = vsel %vm431, %v433, %v429
    %v435 = vmul.f32 1.0, %v434
    %v436 = vrcp.pop %v208
    %v437 = vmul.f32 %v208, %v436
    %v438 = vsub.f32 1.0, %v437
    %v439 = vmul.f32 %v436, %v438
    %v440 = vadd.f32 %v436, %v439
    %vm441 = vweird.f32 %v208
    %vm442 = vweird.f32 %v436
    %vm443 = vmor %vm441, %vm442
    %v444 = vsel %vm443, %v436, %v440
    %v445 = vand.u32 2147483647, %v208
    %vm446 = vcmp.eq.f32.partialorder %v445, 8.507059e+37
    %v447 = vand.u32 %v208, 2147483648
    %v448 = vor.u32 1.1754944e-38, %v447
    %v449 = vsel %vm446, %v448, %v444
    %v450 = vmul.f32 1.0, %v449
    %v451 = vrcp.pop %v209
    %v452 = vmul.f32 %v209, %v451
    %v453 = vsub.f32 1.0, %v452
    %v454 = vmul.f32 %v451, %v453
    %v455 = vadd.f32 %v451, %v454
    %vm456 = vweird.f32 %v209
    %vm457 = vweird.f32 %v451
    %vm458 = vmor %vm456, %vm457
    %v459 = vsel %vm458, %v451, %v455
    %v460 = vand.u32 2147483647, %v209
    %vm461 = vcmp.eq.f32.partialorder %v460, 8.507059e+37
    %v462 = vand.u32 %v209, 2147483648
    %v463 = vor.u32 1.1754944e-38, %v462
    %v464 = vsel %vm461, %v463, %v459
    %v465 = vmul.f32 1.0, %v464
    %v466 = vrcp.pop %v210
    %v467 = vmul.f32 %v210, %v466
    %v468 = vsub.f32 1.0, %v467
    %v469 = vmul.f32 %v466, %v468
    %v470 = vadd.f32 %v466, %v469
    %vm471 = vweird.f32 %v210
    %vm472 = vweird.f32 %v466
    %vm473 = vmor %vm471, %vm472
    %v474 = vsel %vm473, %v466, %v470
    %v475 = vand.u32 2147483647, %v210
    %vm476 = vcmp.eq.f32.partialorder %v475, 8.507059e+37
    %v477 = vand.u32 %v210, 2147483648
    %v478 = vor.u32 1.1754944e-38, %v477
    %v479 = vsel %vm476, %v478, %v474
    %v480 = vmul.f32 1.0, %v479
    %v481 = vrcp.pop %v211
    %v482 = vmul.f32 %v211, %v481
    %v483 = vsub.f32 1.0, %v482
    %v484 = vmul.f32 %v481, %v483
    %v485 = vadd.f32 %v481, %v484
    %vm486 = vweird.f32 %v211
    %vm487 = vweird.f32 %v481
    %vm488 = vmor %vm486, %vm487
    %v489 = vsel %vm488, %v481, %v485
    %v490 = vand.u32 2147483647, %v211
    %vm491 = vcmp.eq.f32.partialorder %v490, 8.507059e+37
    %v492 = vand.u32 %v211, 2147483648
    %v493 = vor.u32 1.1754944e-38, %v492
    %v494 = vsel %vm491, %v493, %v489
    %v495 = vmul.f32 1.0, %v494
    %v496 = vrcp.pop %v212
    %v497 = vmul.f32 %v212, %v496
    %v498 = vsub.f32 1.0, %v497
    %v499 = vmul.f32 %v496, %v498
    %v500 = vadd.f32 %v496, %v499
    %vm501 = vweird.f32 %v212
    %vm502 = vweird.f32 %v496
    %vm503 = vmor %vm501, %vm502
    %v504 = vsel %vm503, %v496, %v500
    %v505 = vand.u32 2147483647, %v212
    %vm506 = vcmp.eq.f32.partialorder %v505, 8.507059e+37
    %v507 = vand.u32 %v212, 2147483648
    %v508 = vor.u32 1.1754944e-38, %v507
    %v509 = vsel %vm506, %v508, %v504
    %v510 = vmul.f32 1.0, %v509
    %v511 = vrcp.pop %v213
    %v512 = vmul.f32 %v213, %v511
    %v513 = vsub.f32 1.0, %v512
    %v514 = vmul.f32 %v511, %v513
    %v515 = vadd.f32 %v511, %v514
    %vm516 = vweird.f32 %v213
    %vm517 = vweird.f32 %v511
    %vm518 = vmor %vm516, %vm517
    %v519 = vsel %vm518, %v511, %v515
    %v520 = vand.u32 2147483647, %v213
    %vm521 = vcmp.eq.f32.partialorder %v520, 8.507059e+37
    %v522 = vand.u32 %v213, 2147483648
    %v523 = vor.u32 1.1754944e-38, %v522
    %v524 = vsel %vm521, %v523, %v519
    %v525 = vmul.f32 1.0, %v524
    %v526 = vrcp.pop %v214
    %v527 = vmul.f32 %v214, %v526
    %v528 = vsub.f32 1.0, %v527
    %v529 = vmul.f32 %v526, %v528
    %v530 = vadd.f32 %v526, %v529
    %vm531 = vweird.f32 %v214
    %vm532 = vweird.f32 %v526
    %vm533 = vmor %vm531, %vm532
    %v534 = vsel %vm533, %v526, %v530
    %v535 = vand.u32 2147483647, %v214
    %vm536 = vcmp.eq.f32.partialorder %v535, 8.507059e+37
    %v537 = vand.u32 %v214, 2147483648
    %v538 = vor.u32 1.1754944e-38, %v537
    %v539 = vsel %vm536, %v538, %v534
    %v540 = vmul.f32 1.0, %v539
    %v541 = vrcp.pop %v215
    %v542 = vmul.f32 %v215, %v541
    %v543 = vsub.f32 1.0, %v542
    %v544 = vmul.f32 %v541, %v543
    %v545 = vadd.f32 %v541, %v544
    %vm546 = vweird.f32 %v215
    %vm547 = vweird.f32 %v541
    %vm548 = vmor %vm546, %vm547
    %v549 = vsel %vm548, %v541, %v545
    %v550 = vand.u32 2147483647, %v215
    %vm551 = vcmp.eq.f32.partialorder %v550, 8.507059e+37
    %v552 = vand.u32 %v215, 2147483648
    %v553 = vor.u32 1.1754944e-38, %v552
    %v554 = vsel %vm551, %v553, %v549
    %v555 = vmul.f32 1.0, %v554
    %v556 = vrcp.pop %v216
    %v557 = vmul.f32 %v216, %v556
    %v558 = vsub.f32 1.0, %v557
    %v559 = vmul.f32 %v556, %v558
    %v560 = vadd.f32 %v556, %v559
    %vm561 = vweird.f32 %v216
    %vm562 = vweird.f32 %v556
    %vm563 = vmor %vm561, %vm562
    %v564 = vsel %vm563, %v556, %v560
    %v565 = vand.u32 2147483647, %v216
    %vm566 = vcmp.eq.f32.partialorder %v565, 8.507059e+37
    %v567 = vand.u32 %v216, 2147483648
    %v568 = vor.u32 1.1754944e-38, %v567
    %v569 = vsel %vm566, %v568, %v564
    %v570 = vmul.f32 1.0, %v569
    %v571 = vrcp.pop %v217
    %v572 = vmul.f32 %v217, %v571
    %v573 = vsub.f32 1.0, %v572
    %v574 = vmul.f32 %v571, %v573
    %v575 = vadd.f32 %v571, %v574
    %vm576 = vweird.f32 %v217
    %vm577 = vweird.f32 %v571
    %vm578 = vmor %vm576, %vm577
    %v579 = vsel %vm578, %v571, %v575
    %v580 = vand.u32 2147483647, %v217
    %vm581 = vcmp.eq.f32.partialorder %v580, 8.507059e+37
    %v582 = vand.u32 %v217, 2147483648
    %v583 = vor.u32 1.1754944e-38, %v582
    %v584 = vsel %vm581, %v583, %v579
    %v585 = vmul.f32 1.0, %v584
    %v586 = vrcp.pop %v218
    %v587 = vmul.f32 %v218, %v586
    %v588 = vsub.f32 1.0, %v587
    %v589 = vmul.f32 %v586, %v588
    %v590 = vadd.f32 %v586, %v589
    %vm591 = vweird.f32 %v218
    %vm592 = vweird.f32 %v586
    %vm593 = vmor %vm591, %vm592
    %v594 = vsel %vm593, %v586, %v590
    %v595 = vand.u32 2147483647, %v218
    %vm596 = vcmp.eq.f32.partialorder %v595, 8.507059e+37
    %v597 = vand.u32 %v218, 2147483648
    %v598 = vor.u32 1.1754944e-38, %v597
    %v599 = vsel %vm596, %v598, %v594
    %v600 = vmul.f32 1.0, %v599
    %v601 = vrcp.pop %v219
    %v602 = vmul.f32 %v219, %v601
    %v603 = vsub.f32 1.0, %v602
    %v604 = vmul.f32 %v601, %v603
    %v605 = vadd.f32 %v601, %v604
    %vm606 = vweird.f32 %v219
    %vm607 = vweird.f32 %v601
    %vm608 = vmor %vm606, %vm607
    %v609 = vsel %vm608, %v601, %v605
    %v610 = vand.u32 2147483647, %v219
    %vm611 = vcmp.eq.f32.partialorder %v610, 8.507059e+37
    %v612 = vand.u32 %v219, 2147483648
    %v613 = vor.u32 1.1754944e-38, %v612
    %v614 = vsel %vm611, %v613, %v609
    %v615 = vmul.f32 1.0, %v614
    %v616 = vrcp.pop %v220
    %v617 = vmul.f32 %v220, %v616
    %v618 = vsub.f32 1.0, %v617
    %v619 = vmul.f32 %v616, %v618
    %v620 = vadd.f32 %v616, %v619
    %vm621 = vweird.f32 %v220
    %vm622 = vweird.f32 %v616
    %vm623 = vmor %vm621, %vm622
    %v624 = vsel %vm623, %v616, %v620
    %v625 = vand.u32 2147483647, %v220
    %vm626 = vcmp.eq.f32.partialorder %v625, 8.507059e+37
    %v627 = vand.u32 %v220, 2147483648
    %v628 = vor.u32 1.1754944e-38, %v627
    %v629 = vsel %vm626, %v628, %v624
    %v630 = vmul.f32 1.0, %v629
    %v631 = vrcp.pop %v221
    %v632 = vmul.f32 %v221, %v631
    %v633 = vsub.f32 1.0, %v632
    %v634 = vmul.f32 %v631, %v633
    %v635 = vadd.f32 %v631, %v634
    %vm636 = vweird.f32 %v221
    %vm637 = vweird.f32 %v631
    %vm638 = vmor %vm636, %vm637
    %v639 = vsel %vm638, %v631, %v635
    %v640 = vand.u32 2147483647, %v221
    %vm641 = vcmp.eq.f32.partialorder %v640, 8.507059e+37
    %v642 = vand.u32 %v221, 2147483648
    %v643 = vor.u32 1.1754944e-38, %v642
    %v644 = vsel %vm641, %v643, %v639
    %v645 = vmul.f32 1.0, %v644
    %v646 = vrcp.pop %v222
    %v647 = vmul.f32 %v222, %v646
    %v648 = vsub.f32 1.0, %v647
    %v649 = vmul.f32 %v646, %v648
    %v650 = vadd.f32 %v646, %v649
    %vm651 = vweird.f32 %v222
    %vm652 = vweird.f32 %v646
    %vm653 = vmor %vm651, %vm652
    %v654 = vsel %vm653, %v646, %v650
    %v655 = vand.u32 2147483647, %v222
    %vm656 = vcmp.eq.f32.partialorder %v655, 8.507059e+37
    %v657 = vand.u32 %v222, 2147483648
    %v658 = vor.u32 1.1754944e-38, %v657
    %v659 = vsel %vm656, %v658, %v654
    %v660 = vmul.f32 1.0, %v659
    %v661 = vrcp.pop %v223
    %v662 = vmul.f32 %v223, %v661
    %v663 = vsub.f32 1.0, %v662
    %v664 = vmul.f32 %v661, %v663
    %v665 = vadd.f32 %v661, %v664
    %vm666 = vweird.f32 %v223
    %vm667 = vweird.f32 %v661
    %vm668 = vmor %vm666, %vm667
    %v669 = vsel %vm668, %v661, %v665
    %v670 = vand.u32 2147483647, %v223
    %vm671 = vcmp.eq.f32.partialorder %v670, 8.507059e+37
    %v672 = vand.u32 %v223, 2147483648
    %v673 = vor.u32 1.1754944e-38, %v672
    %v674 = vsel %vm671, %v673, %v669
    %v675 = vmul.f32 1.0, %v674
    %v676 = vrcp.pop %v224
    %v677 = vmul.f32 %v224, %v676
    %v678 = vsub.f32 1.0, %v677
    %v679 = vmul.f32 %v676, %v678
    %v680 = vadd.f32 %v676, %v679
    %vm681 = vweird.f32 %v224
    %vm682 = vweird.f32 %v676
    %vm683 = vmor %vm681, %vm682
    %v684 = vsel %vm683, %v676, %v680
    %v685 = vand.u32 2147483647, %v224
    %vm686 = vcmp.eq.f32.partialorder %v685, 8.507059e+37
    %v687 = vand.u32 %v224, 2147483648
    %v688 = vor.u32 1.1754944e-38, %v687
    %v689 = vsel %vm686, %v688, %v684
    %v690 = vmul.f32 1.0, %v689
    %v691 = vrcp.pop %v225
    %v692 = vmul.f32 %v225, %v691
    %v693 = vsub.f32 1.0, %v692
    %v694 = vmul.f32 %v691, %v693
    %v695 = vadd.f32 %v691, %v694
    %vm696 = vweird.f32 %v225
    %vm697 = vweird.f32 %v691
    %vm698 = vmor %vm696, %vm697
    %v699 = vsel %vm698, %v691, %v695
    %v700 = vand.u32 2147483647, %v225
    %vm701 = vcmp.eq.f32.partialorder %v700, 8.507059e+37
    %v702 = vand.u32 %v225, 2147483648
    %v703 = vor.u32 1.1754944e-38, %v702
    %v704 = vsel %vm701, %v703, %v699
    %v705 = vmul.f32 1.0, %v704
    %v706 = vmul.f32 %v27, %v240
    %v707 = vmul.f32 %v28, %v255
    %v708 = vmul.f32 %v29, %v270
    %v709 = vmul.f32 %v30, %v285
    %v710 = vmul.f32 %v31, %v300
    %v711 = vmul.f32 %v32, %v315
    %v712 = vmul.f32 %v33, %v330
    %v713 = vmul.f32 %v34, %v345
    %v714 = vmul.f32 %v35, %v360
    %v715 = vmul.f32 %v36, %v375
    %v716 = vmul.f32 %v37, %v390
    %v717 = vmul.f32 %v38, %v405
    %v718 = vmul.f32 %v39, %v420
    %v719 = vmul.f32 %v40, %v435
    %v720 = vmul.f32 %v41, %v450
    %v721 = vmul.f32 %v42, %v465
    %v722 = vmul.f32 %v43, %v480
    %v723 = vmul.f32 %v44, %v495
    %v724 = vmul.f32 %v45, %v510
    %v725 = vmul.f32 %v46, %v525
    %v726 = vmul.f32 %v47, %v540
    %v727 = vmul.f32 %v48, %v555
    %v728 = vmul.f32 %v49, %v570
    %v729 = vmul.f32 %v50, %v585
    %v730 = vmul.f32 %v51, %v600
    %v731 = vmul.f32 %v52, %v615
    %v732 = vmul.f32 %v53, %v630
    %v733 = vmul.f32 %v54, %v645
    %v734 = vmul.f32 %v55, %v660
    %v735 = vmul.f32 %v56, %v675
    %v736 = vmul.f32 %v57, %v690
    %v737 = vmul.f32 %v58, %v705
    %v738 = vround.ne.pseudo %v706
    %v739 = vround.ne.pseudo %v707
    %v740 = vround.ne.pseudo %v708
    %v741 = vround.ne.pseudo %v709
    %v742 = vround.ne.pseudo %v710
    %v743 = vround.ne.pseudo %v711
    %v744 = vround.ne.pseudo %v712
    %v745 = vround.ne.pseudo %v713
    %v746 = vround.ne.pseudo %v714
    %v747 = vround.ne.pseudo %v715
    %v748 = vround.ne.pseudo %v716
    %v749 = vround.ne.pseudo %v717
    %v750 = vround.ne.pseudo %v718
    %v751 = vround.ne.pseudo %v719
    %v752 = vround.ne.pseudo %v720
    %v753 = vround.ne.pseudo %v721
    %v754 = vround.ne.pseudo %v722
    %v755 = vround.ne.pseudo %v723
    %v756 = vround.ne.pseudo %v724
    %v757 = vround.ne.pseudo %v725
    %v758 = vround.ne.pseudo %v726
    %v759 = vround.ne.pseudo %v727
    %v760 = vround.ne.pseudo %v728
    %v761 = vround.ne.pseudo %v729
    %v762 = vround.ne.pseudo %v730
    %v763 = vround.ne.pseudo %v731
    %v764 = vround.ne.pseudo %v732
    %v765 = vround.ne.pseudo %v733
    %v766 = vround.ne.pseudo %v734
    %v767 = vround.ne.pseudo %v735
    %v768 = vround.ne.pseudo %v736
    %v769 = vround.ne.pseudo %v737
    %v770 = vmax.f32 %v738, -128.0
    %v771 = vmax.f32 %v739, -128.0
    %v772 = vmax.f32 %v740, -128.0
    %v773 = vmax.f32 %v741, -128.0
    %v774 = vmax.f32 %v742, -128.0
    %v775 = vmax.f32 %v743, -128.0
    %v776 = vmax.f32 %v744, -128.0
    %v777 = vmax.f32 %v745, -128.0
    %v778 = vmax.f32 %v746, -128.0
    %v779 = vmax.f32 %v747, -128.0
    %v780 = vmax.f32 %v748, -128.0
    %v781 = vmax.f32 %v749, -128.0
    %v782 = vmax.f32 %v750, -128.0
    %v783 = vmax.f32 %v751, -128.0
    %v784 = vmax.f32 %v752, -128.0
    %v785 = vmax.f32 %v753, -128.0
    %v786 = vmax.f32 %v754, -128.0
    %v787 = vmax.f32 %v755, -128.0
    %v788 = vmax.f32 %v756, -128.0
    %v789 = vmax.f32 %v757, -128.0
    %v790 = vmax.f32 %v758, -128.0
    %v791 = vmax.f32 %v759, -128.0
    %v792 = vmax.f32 %v760, -128.0
    %v793 = vmax.f32 %v761, -128.0
    %v794 = vmax.f32 %v762, -128.0
    %v795 = vmax.f32 %v763, -128.0
    %v796 = vmax.f32 %v764, -128.0
    %v797 = vmax.f32 %v765, -128.0
    %v798 = vmax.f32 %v766, -128.0
    %v799 = vmax.f32 %v767, -128.0
    %v800 = vmax.f32 %v768, -128.0
    %v801 = vmax.f32 %v769, -128.0
    %v802 = vmin.f32 %v770, 127.0
    %v803 = vmin.f32 %v771, 127.0
    %v804 = vmin.f32 %v772, 127.0
    %v805 = vmin.f32 %v773, 127.0
    %v806 = vmin.f32 %v774, 127.0
    %v807 = vmin.f32 %v775, 127.0
    %v808 = vmin.f32 %v776, 127.0
    %v809 = vmin.f32 %v777, 127.0
    %v810 = vmin.f32 %v778, 127.0
    %v811 = vmin.f32 %v779, 127.0
    %v812 = vmin.f32 %v780, 127.0
    %v813 = vmin.f32 %v781, 127.0
    %v814 = vmin.f32 %v782, 127.0
    %v815 = vmin.f32 %v783, 127.0
    %v816 = vmin.f32 %v784, 127.0
    %v817 = vmin.f32 %v785, 127.0
    %v818 = vmin.f32 %v786, 127.0
    %v819 = vmin.f32 %v787, 127.0
    %v820 = vmin.f32 %v788, 127.0
    %v821 = vmin.f32 %v789, 127.0
    %v822 = vmin.f32 %v790, 127.0
    %v823 = vmin.f32 %v791, 127.0
    %v824 = vmin.f32 %v792, 127.0
    %v825 = vmin.f32 %v793, 127.0
    %v826 = vmin.f32 %v794, 127.0
    %v827 = vmin.f32 %v795, 127.0
    %v828 = vmin.f32 %v796, 127.0
    %v829 = vmin.f32 %v797, 127.0
    %v830 = vmin.f32 %v798, 127.0
    %v831 = vmin.f32 %v799, 127.0
    %v832 = vmin.f32 %v800, 127.0
    %v833 = vmin.f32 %v801, 127.0
    %v834 = vpack.c.bf16 %v802, %v802
    %v835 = vpack.c.bf16 %v803, %v803
    %v836 = vpack.c.bf16 %v804, %v804
    %v837 = vpack.c.bf16 %v805, %v805
    %v838 = vpack.c.bf16 %v806, %v806
    %v839 = vpack.c.bf16 %v807, %v807
    %v840 = vpack.c.bf16 %v808, %v808
    %v841 = vpack.c.bf16 %v809, %v809
    %v842 = vpack.c.bf16 %v810, %v810
    %v843 = vpack.c.bf16 %v811, %v811
    %v844 = vpack.c.bf16 %v812, %v812
    %v845 = vpack.c.bf16 %v813, %v813
    %v846 = vpack.c.bf16 %v814, %v814
    %v847 = vpack.c.bf16 %v815, %v815
    %v848 = vpack.c.bf16 %v816, %v816
    %v849 = vpack.c.bf16 %v817, %v817
    %v850 = vpack.c.bf16 %v818, %v818
    %v851 = vpack.c.bf16 %v819, %v819
    %v852 = vpack.c.bf16 %v820, %v820
    %v853 = vpack.c.bf16 %v821, %v821
    %v854 = vpack.c.bf16 %v822, %v822
    %v855 = vpack.c.bf16 %v823, %v823
    %v856 = vpack.c.bf16 %v824, %v824
    %v857 = vpack.c.bf16 %v825, %v825
    %v858 = vpack.c.bf16 %v826, %v826
    %v859 = vpack.c.bf16 %v827, %v827
    %v860 = vpack.c.bf16 %v828, %v828
    %v861 = vpack.c.bf16 %v829, %v829
    %v862 = vpack.c.bf16 %v830, %v830
    %v863 = vpack.c.bf16 %v831, %v831
    %v864 = vpack.c.bf16 %v832, %v832
    %v865 = vpack.c.bf16 %v833, %v833
    %866 = vst [vmem:[#allocation5] sm:$0xf] %v834
    %867 = vst [vmem:[#allocation5 + $0x4] sm:$0xf] %v835
    %868 = vst [vmem:[#allocation5 + $0x8] sm:$0xf] %v836
    %869 = vst [vmem:[#allocation5 + $0xc] sm:$0xf] %v837
    %870 = vst [vmem:[#allocation5 + $0x10] sm:$0xf] %v838
    %871 = vst [vmem:[#allocation5 + $0x14] sm:$0xf] %v839
    %872 = vst [vmem:[#allocation5 + $0x18] sm:$0xf] %v840
    %873 = vst [vmem:[#allocation5 + $0x1c] sm:$0xf] %v841
    %874 = vst [vmem:[#allocation5 + $0x20] sm:$0xf] %v842
    %875 = vst [vmem:[#allocation5 + $0x24] sm:$0xf] %v843
    %876 = vst [vmem:[#allocation5 + $0x28] sm:$0xf] %v844
    %877 = vst [vmem:[#allocation5 + $0x2c] sm:$0xf] %v845
    %878 = vst [vmem:[#allocation5 + $0x30] sm:$0xf] %v846
    %879 = vst [vmem:[#allocation5 + $0x34] sm:$0xf] %v847
    %880 = vst [vmem:[#allocation5 + $0x38] sm:$0xf] %v848
    %881 = vst [vmem:[#allocation5 + $0x3c] sm:$0xf] %v849
    %882 = vst [vmem:[#allocation5 + $0x40] sm:$0xf] %v850
    %883 = vst [vmem:[#allocation5 + $0x44] sm:$0xf] %v851
    %884 = vst [vmem:[#allocation5 + $0x48] sm:$0xf] %v852
    %885 = vst [vmem:[#allocation5 + $0x4c] sm:$0xf] %v853
    %886 = vst [vmem:[#allocation5 + $0x50] sm:$0xf] %v854
    %887 = vst [vmem:[#allocation5 + $0x54] sm:$0xf] %v855
    %888 = vst [vmem:[#allocation5 + $0x58] sm:$0xf] %v856
    %889 = vst [vmem:[#allocation5 + $0x5c] sm:$0xf] %v857
    %890 = vst [vmem:[#allocation5 + $0x60] sm:$0xf] %v858
    %891 = vst [vmem:[#allocation5 + $0x64] sm:$0xf] %v859
    %892 = vst [vmem:[#allocation5 + $0x68] sm:$0xf] %v860
    %893 = vst [vmem:[#allocation5 + $0x6c] sm:$0xf] %v861
    %894 = vst [vmem:[#allocation5 + $0x70] sm:$0xf] %v862
    %895 = vst [vmem:[#allocation5 + $0x74] sm:$0xf] %v863
    %896 = vst [vmem:[#allocation5 + $0x78] sm:$0xf] %v864
    %897 = vst [vmem:[#allocation5 + $0x7c] sm:$0xf] %v865
    %vm898 = vcmask 7168
    %899 = vst.msk [vmem:[%s2] sm:$0xff] %vm898, %v194
    %900 = vst.msk [vmem:[%s2 + $0x8] sm:$0xff] %vm898, %v195
    %901 = vst.msk [vmem:[%s2 + $0x10] sm:$0xff] %vm898, %v196
    %902 = vst.msk [vmem:[%s2 + $0x18] sm:$0xff] %vm898, %v197
    %903 = vst.msk [vmem:[%s2 + $0x20] sm:$0xff] %vm898, %v198
    %904 = vst.msk [vmem:[%s2 + $0x28] sm:$0xff] %vm898, %v199
    %905 = vst.msk [vmem:[%s2 + $0x30] sm:$0xff] %vm898, %v200
    %906 = vst.msk [vmem:[%s2 + $0x38] sm:$0xff] %vm898, %v201
    %907 = vst.msk [vmem:[%s2 + $0x40] sm:$0xff] %vm898, %v202
    %908 = vst.msk [vmem:[%s2 + $0x48] sm:$0xff] %vm898, %v203
    %909 = vst.msk [vmem:[%s2 + $0x50] sm:$0xff] %vm898, %v204
    %910 = vst.msk [vmem:[%s2 + $0x58] sm:$0xff] %vm898, %v205
    %911 = vst.msk [vmem:[%s2 + $0x60] sm:$0xff] %vm898, %v206
    %912 = vst.msk [vmem:[%s2 + $0x68] sm:$0xff] %vm898, %v207
    %913 = vst.msk [vmem:[%s2 + $0x70] sm:$0xff] %vm898, %v208
    %914 = vst.msk [vmem:[%s2 + $0x78] sm:$0xff] %vm898, %v209
    %915 = vst.msk [vmem:[%s2 + $0x80] sm:$0xff] %vm898, %v210
    %916 = vst.msk [vmem:[%s2 + $0x88] sm:$0xff] %vm898, %v211
    %917 = vst.msk [vmem:[%s2 + $0x90] sm:$0xff] %vm898, %v212
    %918 = vst.msk [vmem:[%s2 + $0x98] sm:$0xff] %vm898, %v213
    %919 = vst.msk [vmem:[%s2 + $0xa0] sm:$0xff] %vm898, %v214
    %920 = vst.msk [vmem:[%s2 + $0xa8] sm:$0xff] %vm898, %v215
    %921 = vst.msk [vmem:[%s2 + $0xb0] sm:$0xff] %vm898, %v216
    %922 = vst.msk [vmem:[%s2 + $0xb8] sm:$0xff] %vm898, %v217
    %923 = vst.msk [vmem:[%s2 + $0xc0] sm:$0xff] %vm898, %v218
    %924 = vst.msk [vmem:[%s2 + $0xc8] sm:$0xff] %vm898, %v219
    %925 = vst.msk [vmem:[%s2 + $0xd0] sm:$0xff] %vm898, %v220
    %926 = vst.msk [vmem:[%s2 + $0xd8] sm:$0xff] %vm898, %v221
    %927 = vst.msk [vmem:[%s2 + $0xe0] sm:$0xff] %vm898, %v222
    %928 = vst.msk [vmem:[%s2 + $0xe8] sm:$0xff] %vm898, %v223
    %929 = vst.msk [vmem:[%s2 + $0xf0] sm:$0xff] %vm898, %v224
    %930 = vst.msk [vmem:[%s2 + $0xf8] sm:$0xff] %vm898, %v225
    // Predicated region
    $region10: #{tpu_custom_call.1} parent=1 // pred_check
      _
    $region11: #{tpu_custom_call.1} parent=1 // pred_check_branch
      %932 = sbr.rel (0) target = $region13
    $region12: #{tpu_custom_call.1} parent=1 // pred_region
      %934 = vsyncadd [#allocation4], 0
      %s935 = sshll.u32 [#allocation5], 4
      %s936 = int_to_ptr.vmem [resolvable:$true] %s935
      %s937 = sshll.u32 %s1, 4
      %s938 = int_to_ptr.hbm [resolvable:$true] %s937
      %943 = dma.vmem_to_hbm [thread:$0]  %s936, 2048, %s938, [#allocation4], 64, 64, 4
    $region13: #{tpu_custom_call.1} parent=1 // pred_fallthru
      _
    // Predicated region
    $region14: #{tpu_custom_call.1} parent=1 // pred_check
      _
    $region15: #{tpu_custom_call.1} parent=1 // pred_check_branch
      %945 = sbr.rel (0) target = $region17
    $region16: #{tpu_custom_call.1} parent=1 // pred_region
      _
    $region17: #{tpu_custom_call.1} parent=1 // pred_fallthru
      _
    // Predicated region
    $region18: #{tpu_custom_call.1} parent=1 // pred_check
      _
    $region19: #{tpu_custom_call.1} parent=1 // pred_check_branch
      %947 = sbr.rel (0) target = $region21
    $region20: #{tpu_custom_call.1} parent=1 // pred_region
      %949 = dma.done [#allocation4], 2048
    $region21: #{tpu_custom_call.1} parent=1 // pred_fallthru
      _
    // Predicated region
    $region22: #{tpu_custom_call.1} parent=1 // pred_check
      _
    $region23: #{tpu_custom_call.1} parent=1 // pred_check_branch
      %951 = sbr.rel (0) target = $region25
    $region24: #{tpu_custom_call.1} parent=1 // pred_region
      _
    $region25: #{tpu_custom_call.1} parent=1 // pred_fallthru
      _
    %952 = vsyncpa [#allocation3], 1
    %953 = vsyncpa [#allocation4], 1

</llo_original>
